<compile_context>
chip_gen: v7x
topology: tpu7x:2x2x1
jax: 0.10.0
libtpu: 0.0.40
codegen_flags: <defaults>
</compile_context>

<pallas_src>
import jax
import jax.numpy as jnp
from jax import lax
from jax.experimental import pallas as pl
from jax.experimental.pallas import tpu as pltpu


def _round_up(x, m):
    return ((x + m - 1) // m) * m


# ---------------------------------------------------------------------------
# Prologue kernel: pre_fusion once over the N rows.
#   q        = qry_feats @ W_pre + b_pre
#   q_scaled = q * w_post            (post_fusion weight folded into left stream)
# ---------------------------------------------------------------------------
def _pre_fusion_kernel(x_ref, w_ref, b_ref, wpost_ref, qs_ref, q_ref):
    q = (jnp.dot(x_ref[...], w_ref[...], preferred_element_type=jnp.float32)
         + b_ref[...])
    q_ref[...] = q.astype(q_ref.dtype)
    qs_ref[...] = (q * wpost_ref[...]).astype(qs_ref.dtype)


# ---------------------------------------------------------------------------
# Pairwise kernel: dup_logits[i, j] = <q_scaled[i, :], q[j, :]> + b_post
# (== sum_h q[i,h]*q[j,h]*w_post[h] + b_post == 'mul' fusion + Linear(H->1)).
# Contraction is on the minor/lane axis of both operands -> no transpose.
# ---------------------------------------------------------------------------
def _pairwise_kernel(qi_ref, qj_ref, bpost_ref, o_ref):
    logits = lax.dot_general(
        qi_ref[...], qj_ref[...],
        dimension_numbers=(((1,), (1,)), ((), ())),
        preferred_element_type=jnp.float32,
    )
    o_ref[...] = (logits + bpost_ref[0, 0]).astype(o_ref.dtype)


def base_duplicate_head_forward_pred(qry_feats, params, *, tile=None,
                                     pairwise_dtype=None, out_dtype=None):
    """Pallas implementation of BaseDuplicateHead.forward_pred (fusion_type='mul').

    pairwise_dtype: dtype of the operands fed to the N^2*H contraction
      (None -> float32). bfloat16 roughly 2-4x the MXU rate if tolerance permits;
      accumulation stays in float32 either way.
    out_dtype: dtype of dup_logits (None -> qry_feats.dtype). bfloat16 halves the
      dominant N^2 output writeback if downstream tolerates it.
    """
    N, D = qry_feats.shape
    H = params["w_pre"].shape[1]
    b_post = params["b_post"]
    assert b_post.shape == (1, 1), f"b_post must have shape (1, 1), got {b_post.shape}"

    compute_dtype = jnp.float32 if pairwise_dtype is None else pairwise_dtype
    out_dtype = qry_feats.dtype if out_dtype is None else out_dtype

    # ---- Prologue: pre_fusion computed once (N x H), not once per output tile.
    tq = N if N <= 512 else 512
    q_scaled, q = pl.pallas_call(
        _pre_fusion_kernel,
        out_shape=(jax.ShapeDtypeStruct((N, H), compute_dtype),
                   jax.ShapeDtypeStruct((N, H), compute_dtype)),
        grid_spec=pltpu.PrefetchScalarGridSpec(
            num_scalar_prefetch=0,
            grid=(pl.cdiv(N, tq),),
            in_specs=[
                pl.BlockSpec((tq, D), lambda i: (i, 0)),   # qry_feats row tile
                pl.BlockSpec((D, H), lambda i: (0, 0)),    # W_pre (resident)
                pl.BlockSpec((1, H), lambda i: (0, 0)),    # b_pre
                pl.BlockSpec((1, H), lambda i: (0, 0)),    # w_post
            ],
            out_specs=(pl.BlockSpec((tq, H), lambda i: (i, 0)),
                       pl.BlockSpec((tq, H), lambda i: (i, 0))),
        ),
        compiler_params=pltpu.CompilerParams(
            dimension_semantics=("parallel",)),
    )(qry_feats, params["w_pre"], params["b_pre"], params["w_post"])

    # ---- Tile selection for the N x N pairwise stage. -----------------------
    # Cap 1024: ~14 MiB double-buffered per step, safe on v5e/v6e (128 MiB VMEM)
    # and v7x (64 MiB), while amortizing ~0.35us per-grid-step overhead and
    # keeping lane-dense output stores.
    cap = 1024 if tile is None else tile
    tile_j = N if N <= cap else cap            # lane axis of the output
    if N <= 128:
        tile_i = N                             # single full-extent block
    elif N <= cap:
        # v7x megacore: give the parallel i-axis >= 2 blocks so both
        # TensorCores get work; trailing partial block is masked by Pallas.
        tile_i = _round_up(pl.cdiv(N, 2), 128)
    else:
        tile_i = cap

    grid = (pl.cdiv(N, tile_i), pl.cdiv(N, tile_j))

    out = pl.pallas_call(
        _pairwise_kernel,
        out_shape=jax.ShapeDtypeStruct((N, N), out_dtype),
        grid_spec=pltpu.PrefetchScalarGridSpec(
            num_scalar_prefetch=0,
            grid=grid,
            in_specs=[
                pl.BlockSpec((tile_i, H), lambda i, j: (i, 0)),     # q_scaled rows
                pl.BlockSpec((tile_j, H), lambda i, j: (j, 0)),     # q rows
                pl.BlockSpec(memory_space=pltpu.MemorySpace.SMEM),  # b_post scalar
            ],
            out_specs=pl.BlockSpec((tile_i, tile_j), lambda i, j: (i, j)),
        ),
        compiler_params=pltpu.CompilerParams(
            dimension_semantics=("parallel", "parallel"),
            vmem_limit_bytes=32 * 1024 * 1024,
        ),
    )(q_scaled, q, b_post)

    return out  # storage_dict['dup_logits'], shape [num_feats, num_feats]


# ---------------------------------------------------------------------------
# Pure-JAX reference (mirrors the PyTorch code path literally)
# ---------------------------------------------------------------------------
def reference_forward_pred(qry_feats, params):
    q = qry_feats @ params["w_pre"] + params["b_pre"]          # pre_fusion
    dup_feats = q[:, None, :] * q[None, :, :]                  # fusion_type == 'mul'
    N = q.shape[0]
    flat = dup_feats.reshape(N * N, -1)
    flat = flat @ params["w_post"].T + params["b_post"][0]     # post_fusion Linear(H->1)
    dup_feats = flat.reshape(N, N, -1)
    return jnp.squeeze(dup_feats, axis=2)                      # squeeze(dim=2)


if __name__ == "__main__":
    def make_inputs(N, D, H):
        key = jax.random.PRNGKey(0)
        k_q, k_wp, k_bp, k_wpost, k_bpost = jax.random.split(key, 5)
        qry_feats = jax.random.normal(k_q, (N, D), dtype=jnp.float32)
        params = {
            "w_pre": jax.random.normal(k_wp, (D, H), jnp.float32) * (1.0 / D ** 0.5),
            "b_pre": jax.random.normal(k_bp, (1, H), jnp.float32) * 0.01,
            "w_post": jax.random.normal(k_wpost, (1, H), jnp.float32) * (1.0 / H ** 0.5),
            "b_post": jax.random.normal(k_bpost, (1, 1), jnp.float32) * 0.01,
        }
        return qry_feats, params

    # Small shapes consistent with the module: num_feats=128, qry_feat_size=32, hidden=64.
    N, D, H = 128, 32, 64
    qry_feats, params = make_inputs(N, D, H)

    dup_logits = jax.block_until_ready(
        base_duplicate_head_forward_pred(qry_feats, params))
    ref = reference_forward_pred(qry_feats, params)
    assert dup_logits.shape == (N, N)
    assert jnp.allclose(dup_logits, ref, rtol=1e-4, atol=1e-4), (
        float(jnp.max(jnp.abs(dup_logits - ref))))

    # Optional fast path: bf16 operands for the N^2*H contraction (f32 accumulate).
    dup_bf16 = jax.block_until_ready(
        base_duplicate_head_forward_pred(qry_feats, params,
                                         pairwise_dtype=jnp.bfloat16))
    assert jnp.allclose(dup_bf16, ref, rtol=5e-2, atol=5e-2), (
        float(jnp.max(jnp.abs(dup_bf16 - ref))))

    # Non-tile-aligned num_feats: no pad + slice round-trip; Pallas masks the
    # trailing partial blocks (verifies the edge-block path end to end).
    N2 = 200
    qf2, params2 = make_inputs(N2, D, H)
    out2 = jax.block_until_ready(base_duplicate_head_forward_pred(qf2, params2))
    ref2 = reference_forward_pred(qf2, params2)
    assert out2.shape == (N2, N2)
    assert jnp.allclose(out2, ref2, rtol=1e-4, atol=1e-4), (
        float(jnp.max(jnp.abs(out2 - ref2))))

    # TODO(synk): forward_loss mode (matcher + config-driven loss modules) is
    # external control flow and is not part of this kernel.
    print("KERNEL_OK")
</pallas_src>

<mosaic_0001>
module attributes {stable_mosaic.version = 11 : i64} {
  func.func @_pre_fusion_kernel(%arg0: i32, %arg1: memref<128x32xf32, #tpu.memory_space<vmem>>, %arg2: memref<32x64xf32, #tpu.memory_space<vmem>>, %arg3: memref<1x64xf32, #tpu.memory_space<vmem>>, %arg4: memref<1x64xf32, #tpu.memory_space<vmem>>, %arg5: memref<128x64xf32, #tpu.memory_space<vmem>>, %arg6: memref<128x64xf32, #tpu.memory_space<vmem>>) attributes {dimension_semantics = [#tpu.dimension_semantics<parallel>], iteration_bounds = array<i64: 1>, scalar_prefetch = 0 : i64, scratch_operands = 0 : i64, tpu.core_type = #tpu.core_type<tc>, window_params = [{transform_indices = @transform_0, window_bounds = array<i64: 128, 32>}, {pipeline_mode = #tpu.pipeline_mode<synchronous>, transform_indices = @transform_1, window_bounds = array<i64: 32, 64>}, {pipeline_mode = #tpu.pipeline_mode<synchronous>, transform_indices = @transform_2, window_bounds = array<i64: 1, 64>}, {pipeline_mode = #tpu.pipeline_mode<synchronous>, transform_indices = @transform_3, window_bounds = array<i64: 1, 64>}, {transform_indices = @transform_4, window_bounds = array<i64: 128, 64>}, {transform_indices = @transform_5, window_bounds = array<i64: 128, 64>}]} {
    %c0 = arith.constant 0 : index
    %c0_0 = arith.constant 0 : index
    %0 = vector.load %arg1[%c0, %c0_0] : memref<128x32xf32, #tpu.memory_space<vmem>>, vector<128x32xf32>
    %c0_1 = arith.constant 0 : index
    %c0_2 = arith.constant 0 : index
    %1 = vector.load %arg2[%c0_1, %c0_2] : memref<32x64xf32, #tpu.memory_space<vmem>>, vector<32x64xf32>
    %cst = arith.constant dense<0.000000e+00> : vector<128x64xf32>
    %2 = tpu.matmul %0, %1, %cst {dimension_numbers = #tpu.dot_dimension_numbers<[1], [0], [0], [1], [0, 0, 1, 1], [], []>} : vector<128x32xf32>, vector<32x64xf32>, vector<128x64xf32> -> vector<128x64xf32>
    %c0_3 = arith.constant 0 : index
    %c0_4 = arith.constant 0 : index
    %3 = vector.load %arg3[%c0_3, %c0_4] : memref<1x64xf32, #tpu.memory_space<vmem>>, vector<1x64xf32>
    %4 = vector.broadcast %3 : vector<1x64xf32> to vector<128x64xf32>
    %5 = arith.addf %2, %4 : vector<128x64xf32>
    %c0_5 = arith.constant 0 : index
    %c0_6 = arith.constant 0 : index
    %6 = vector.load %arg6[%c0_5, %c0_6] : memref<128x64xf32, #tpu.memory_space<vmem>>, vector<128x64xf32>
    tpu.vector_store %arg6[%c0_5, %c0_6], %5 {strides = array<i32>} : memref<128x64xf32, #tpu.memory_space<vmem>>, vector<128x64xf32>,
    %c0_7 = arith.constant 0 : index
    %c0_8 = arith.constant 0 : index
    %7 = vector.load %arg4[%c0_7, %c0_8] : memref<1x64xf32, #tpu.memory_space<vmem>>, vector<1x64xf32>
    %8 = vector.broadcast %7 : vector<1x64xf32> to vector<128x64xf32>
    %9 = arith.mulf %5, %8 : vector<128x64xf32>
    %c0_9 = arith.constant 0 : index
    %c0_10 = arith.constant 0 : index
    %10 = vector.load %arg5[%c0_9, %c0_10] : memref<128x64xf32, #tpu.memory_space<vmem>>, vector<128x64xf32>
    tpu.vector_store %arg5[%c0_9, %c0_10], %9 {strides = array<i32>} : memref<128x64xf32, #tpu.memory_space<vmem>>, vector<128x64xf32>,
    return
  }
  func.func @transform_0(%arg0: i32) -> (i32, i32) {
    %c0_i32 = arith.constant 0 : i32
    %c0_i32_0 = arith.constant 0 : i32
    return %arg0, %c0_i32 : i32, i32
  }
  func.func @transform_1(%arg0: i32) -> (i32, i32) {
    %c0_i32 = arith.constant 0 : i32
    %c0_i32_0 = arith.constant 0 : i32
    %c0_i32_1 = arith.constant 0 : i32
    return %c0_i32, %c0_i32_0 : i32, i32
  }
  func.func @transform_2(%arg0: i32) -> (i32, i32) {
    %c0_i32 = arith.constant 0 : i32
    %c0_i32_0 = arith.constant 0 : i32
    %c0_i32_1 = arith.constant 0 : i32
    return %c0_i32, %c0_i32_0 : i32, i32
  }
  func.func @transform_3(%arg0: i32) -> (i32, i32) {
    %c0_i32 = arith.constant 0 : i32
    %c0_i32_0 = arith.constant 0 : i32
    %c0_i32_1 = arith.constant 0 : i32
    return %c0_i32, %c0_i32_0 : i32, i32
  }
  func.func @transform_4(%arg0: i32) -> (i32, i32) {
    %c0_i32 = arith.constant 0 : i32
    %c0_i32_0 = arith.constant 0 : i32
    return %arg0, %c0_i32 : i32, i32
  }
  func.func @transform_5(%arg0: i32) -> (i32, i32) {
    %c0_i32 = arith.constant 0 : i32
    %c0_i32_0 = arith.constant 0 : i32
    return %arg0, %c0_i32 : i32, i32
  }
}

</mosaic_0001>

<llo_original>
// kernel: tpu_custom_call.1
$region0: #{tpu_custom_call.1}
  #allocation0 [shape = 'u32[]', space=smem, size = 0x4, offset = 0x4, fixed_abs, tag = 'smem constant byte address 0x4 - core index']
  #allocation1 [shape = 'u32[144,128]{1,0:T(1,128)}', space=vmem, size = 0x12000, scoped, tag = 'internal scratch']
  %s0 = inlined_call_operand.vmem [shape: f32[128,32], index: 0, kind: input, shape index: {}]
  %s1 = inlined_call_operand.vmem [shape: f32[32,64], index: 1, kind: input, shape index: {}]
  %s2 = inlined_call_operand.vmem [shape: f32[1,64], index: 2, kind: input, shape index: {}]
  %s3 = inlined_call_operand.vmem [shape: f32[1,64], index: 3, kind: input, shape index: {}]
  %s4 = inlined_call_operand.vmem [shape: f32[128,64], index: 4, kind: output, shape index: {0}]
  %s5 = inlined_call_operand.vmem [shape: f32[128,64], index: 5, kind: output, shape index: {1}]
  %6 = xla_tuple %s4, %s5
  %s7 = sld [smem:[#allocation0]]
  $region34: #{tpu_custom_call.1} parent=0
    _
  %s9 = ssub.s32 1, %s7
  %s10 = scalar_select 0, %s9, %s7
  // Predicated region
  $region2: #{tpu_custom_call.1} parent=0 // pred_check
    _
  $region3: #{tpu_custom_call.1} parent=0 // pred_check_branch
    %12 = sbr.rel (0) target = $region5
  $region4: #{tpu_custom_call.1} parent=0 // pred_region
    _
  $region5: #{tpu_custom_call.1} parent=0 // pred_fallthru
    _
  // Predicated region
  $region6: #{tpu_custom_call.1} parent=0 // pred_check
    _
  $region7: #{tpu_custom_call.1} parent=0 // pred_check_branch
    %14 = sbr.rel (0) target = $region9
  $region8: #{tpu_custom_call.1} parent=0 // pred_region
    _
  $region9: #{tpu_custom_call.1} parent=0 // pred_fallthru
    _
  // Predicated region
  $region10: #{tpu_custom_call.1} parent=0 // pred_check
    _
  $region11: #{tpu_custom_call.1} parent=0 // pred_check_branch
    %16 = sbr.rel (0) target = $region13
  $region12: #{tpu_custom_call.1} parent=0 // pred_region
    _
  $region13: #{tpu_custom_call.1} parent=0 // pred_fallthru
    _
  // Predicated region
  $region14: #{tpu_custom_call.1} parent=0 // pred_check
    _
  $region15: #{tpu_custom_call.1} parent=0 // pred_check_branch
    %18 = sbr.rel (0) target = $region17
  $region16: #{tpu_custom_call.1} parent=0 // pred_region
    _
  $region17: #{tpu_custom_call.1} parent=0 // pred_fallthru
    _
  %v19 = vld [vmem:[%s0] sm:$0xff]
  %v20 = vld [vmem:[%s0 + $0x8] sm:$0xff]
  %v21 = vld [vmem:[%s0 + $0x10] sm:$0xff]
  %v22 = vld [vmem:[%s0 + $0x18] sm:$0xff]
  %v23 = vld [vmem:[%s0 + $0x20] sm:$0xff]
  %v24 = vld [vmem:[%s0 + $0x28] sm:$0xff]
  %v25 = vld [vmem:[%s0 + $0x30] sm:$0xff]
  %v26 = vld [vmem:[%s0 + $0x38] sm:$0xff]
  %v27 = vld [vmem:[%s0 + $0x40] sm:$0xff]
  %v28 = vld [vmem:[%s0 + $0x48] sm:$0xff]
  %v29 = vld [vmem:[%s0 + $0x50] sm:$0xff]
  %v30 = vld [vmem:[%s0 + $0x58] sm:$0xff]
  %v31 = vld [vmem:[%s0 + $0x60] sm:$0xff]
  %v32 = vld [vmem:[%s0 + $0x68] sm:$0xff]
  %v33 = vld [vmem:[%s0 + $0x70] sm:$0xff]
  %v34 = vld [vmem:[%s0 + $0x78] sm:$0xff]
  %v35 = vld [vmem:[%s1] sm:$0xff]
  %v36 = vld [vmem:[%s1 + $0x8] sm:$0xff]
  %v37 = vld [vmem:[%s1 + $0x10] sm:$0xff]
  %v38 = vld [vmem:[%s1 + $0x18] sm:$0xff]
  %v39 = vld [vmem:[%s2] sm:$0x1]
  %v41 = vlaneseq
  %v42 = vshrl.u32 %v41, 7
  %v43 = vsub.s32 0, %v42
  %v44 = vrot.slane %v39, %v43
  %vm46 = vcmask 261120
  %v48 = vsel %vm46, %v19, 0
  %v51 = vsel %vm46, %v20, 0
  %v54 = vsel %vm46, %v21, 0
  %v57 = vsel %vm46, %v22, 0
  %v60 = vsel %vm46, %v23, 0
  %v63 = vsel %vm46, %v24, 0
  %v66 = vsel %vm46, %v25, 0
  %v69 = vsel %vm46, %v26, 0
  %v72 = vsel %vm46, %v27, 0
  %v75 = vsel %vm46, %v28, 0
  %v78 = vsel %vm46, %v29, 0
  %v81 = vsel %vm46, %v30, 0
  %v84 = vsel %vm46, %v31, 0
  %v87 = vsel %vm46, %v32, 0
  %v90 = vsel %vm46, %v33, 0
  %v93 = vsel %vm46, %v34, 0
  %95 = vmatprep.subr.mxu0 0.0
  %96 = vmatpush1.msra.mxu0 %v35
  %97 = vmatprep.subr.mxu0 0.0
  %98 = vmatpush1.msra.mxu0 %v36
  %99 = vmatprep.subr.mxu0 0.0
  %100 = vmatpush1.msra.mxu0 %v37
  %101 = vmatprep.subr.mxu0 0.0
  %102 = vmatpush1.msra.mxu0 %v38
  %103 = vmatprep.subr.mxu0 0.0
  %104 = vmatpush1.msra.mxu0 0.0
  %105 = vmatprep.subr.mxu0 0.0
  %106 = vmatpush1.msra.mxu0 0.0
  %107 = vmatprep.subr.mxu0 0.0
  %108 = vmatpush1.msra.mxu0 0.0
  %109 = vmatprep.subr.mxu0 0.0
  %110 = vmatpush1.msra.mxu0 0.0
  %111 = vmatprep.subr.mxu0 0.0
  %112 = vmatpush1.msra.mxu0 0.0
  %113 = vmatprep.subr.mxu0 0.0
  %114 = vmatpush1.msra.mxu0 0.0
  %115 = vmatprep.subr.mxu0 0.0
  %116 = vmatpush1.msra.mxu0 0.0
  %117 = vmatprep.subr.mxu0 0.0
  %118 = vmatpush1.msra.mxu0 0.0
  %119 = vmatprep.subr.mxu0 0.0
  %120 = vmatpush1.msra.mxu0 0.0
  %121 = vmatprep.subr.mxu0 0.0
  %122 = vmatpush1.msra.mxu0 0.0
  %123 = vmatprep.subr.mxu0 0.0
  %124 = vmatpush1.msra.mxu0 0.0
  %125 = vmatprep.subr.mxu0 0.0
  %126 = vmatpush1.msra.mxu0 0.0
  %127 = vmatprep.subr.mxu0 0.0
  %128 = vmatpush1.msra.mxu0 0.0
  %129 = vmatprep.subr.mxu0 0.0
  %130 = vmatpush1.msra.mxu0 0.0
  %131 = vmatprep.subr.mxu0 0.0
  %132 = vmatpush1.msra.mxu0 0.0
  %133 = vmatprep.subr.mxu0 0.0
  %134 = vmatpush1.msra.mxu0 0.0
  %135 = vmatprep.subr.mxu0 0.0
  %136 = vmatpush1.msra.mxu0 0.0
  %137 = vmatprep.subr.mxu0 0.0
  %138 = vmatpush1.msra.mxu0 0.0
  %139 = vmatprep.subr.mxu0 0.0
  %140 = vmatpush1.msra.mxu0 0.0
  %141 = vmatprep.subr.mxu0 0.0
  %142 = vmatpush1.msra.mxu0 0.0
  %143 = vmatprep.subr.mxu0 0.0
  %144 = vmatpush1.msra.mxu0 0.0
  %145 = vmatprep.subr.mxu0 0.0
  %146 = vmatpush1.msra.mxu0 0.0
  %147 = vmatprep.subr.mxu0 0.0
  %148 = vmatpush1.msra.mxu0 0.0
  %149 = vmatprep.subr.mxu0 0.0
  %150 = vmatpush1.msra.mxu0 0.0
  %151 = vmatprep.subr.mxu0 0.0
  %152 = vmatpush1.msra.mxu0 0.0
  %153 = vmatprep.subr.mxu0 0.0
  %154 = vmatpush1.msra.mxu0 0.0
  %155 = vmatprep.subr.mxu0 0.0
  %156 = vmatpush1.msra.mxu0 0.0
  %157 = vmatprep.subr.mxu0 0.0
  %158 = vmatpush1.msra.mxu0 0.0
  %159 = vmatprep.mubr.f32.mxu0 0.0
  %160 = vmatmul.mubr.f32.gmra.mrb[0].mxu0 %v48
  %v161 = vpop.f32.mrb[0].mxu0
  %v162 = vadd.f32 %v44, %v161
  %v163 = vpop.f32.mrb[0].mxu0
  %164 = vmatprep.mubr.f32.mxu0 0.0
  %165 = vmatmul.mubr.f32.gmra.mrb[0].mxu0 %v51
  %v166 = vpop.f32.mrb[0].mxu0
  %v167 = vadd.f32 %v44, %v166
  %v168 = vpop.f32.mrb[0].mxu0
  %169 = vmatprep.mubr.f32.mxu0 0.0
  %170 = vmatmul.mubr.f32.gmra.mrb[0].mxu0 %v54
  %v171 = vpop.f32.mrb[0].mxu0
  %v172 = vadd.f32 %v44, %v171
  %v173 = vpop.f32.mrb[0].mxu0
  %174 = vmatprep.mubr.f32.mxu0 0.0
  %175 = vmatmul.mubr.f32.gmra.mrb[0].mxu0 %v57
  %v176 = vpop.f32.mrb[0].mxu0
  %v177 = vadd.f32 %v44, %v176
  %v178 = vpop.f32.mrb[0].mxu0
  %179 = vmatprep.mubr.f32.mxu0 0.0
  %180 = vmatmul.mubr.f32.gmra.mrb[0].mxu0 %v60
  %v181 = vpop.f32.mrb[0].mxu0
  %v182 = vadd.f32 %v44, %v181
  %v183 = vpop.f32.mrb[0].mxu0
  %184 = vmatprep.mubr.f32.mxu0 0.0
  %185 = vmatmul.mubr.f32.gmra.mrb[0].mxu0 %v63
  %v186 = vpop.f32.mrb[0].mxu0
  %v187 = vadd.f32 %v44, %v186
  %v188 = vpop.f32.mrb[0].mxu0
  %189 = vmatprep.mubr.f32.mxu0 0.0
  %190 = vmatmul.mubr.f32.gmra.mrb[0].mxu0 %v66
  %v191 = vpop.f32.mrb[0].mxu0
  %v192 = vadd.f32 %v44, %v191
  %v193 = vpop.f32.mrb[0].mxu0
  %194 = vmatprep.mubr.f32.mxu0 0.0
  %195 = vmatmul.mubr.f32.gmra.mrb[0].mxu0 %v69
  %v196 = vpop.f32.mrb[0].mxu0
  %v197 = vadd.f32 %v44, %v196
  %v198 = vpop.f32.mrb[0].mxu0
  %199 = vmatprep.mubr.f32.mxu0 0.0
  %200 = vmatmul.mubr.f32.gmra.mrb[0].mxu0 %v72
  %v201 = vpop.f32.mrb[0].mxu0
  %v202 = vadd.f32 %v44, %v201
  %v203 = vpop.f32.mrb[0].mxu0
  %204 = vmatprep.mubr.f32.mxu0 0.0
  %205 = vmatmul.mubr.f32.gmra.mrb[0].mxu0 %v75
  %v206 = vpop.f32.mrb[0].mxu0
  %v207 = vadd.f32 %v44, %v206
  %v208 = vpop.f32.mrb[0].mxu0
  %209 = vmatprep.mubr.f32.mxu0 0.0
  %210 = vmatmul.mubr.f32.gmra.mrb[0].mxu0 %v78
  %v211 = vpop.f32.mrb[0].mxu0
  %v212 = vadd.f32 %v44, %v211
  %v213 = vpop.f32.mrb[0].mxu0
  %214 = vmatprep.mubr.f32.mxu0 0.0
  %215 = vmatmul.mubr.f32.gmra.mrb[0].mxu0 %v81
  %v216 = vpop.f32.mrb[0].mxu0
  %v217 = vadd.f32 %v44, %v216
  %v218 = vpop.f32.mrb[0].mxu0
  %219 = vmatprep.mubr.f32.mxu0 0.0
  %220 = vmatmul.mubr.f32.gmra.mrb[0].mxu0 %v84
  %v221 = vpop.f32.mrb[0].mxu0
  %v222 = vadd.f32 %v44, %v221
  %v223 = vpop.f32.mrb[0].mxu0
  %224 = vmatprep.mubr.f32.mxu0 0.0
  %225 = vmatmul.mubr.f32.gmra.mrb[0].mxu0 %v87
  %v226 = vpop.f32.mrb[0].mxu0
  %v227 = vadd.f32 %v44, %v226
  %v228 = vpop.f32.mrb[0].mxu0
  %229 = vmatprep.mubr.f32.mxu0 0.0
  %230 = vmatmul.mubr.f32.gmra.mrb[0].mxu0 %v90
  %v231 = vpop.f32.mrb[0].mxu0
  %v232 = vadd.f32 %v44, %v231
  %v233 = vpop.f32.mrb[0].mxu0
  %234 = vmatprep.mubr.f32.mxu0 0.0
  %235 = vmatmul.mubr.f32.gmra.mrb[0].mxu0 %v93
  %v236 = vpop.f32.mrb[0].mxu0
  %v237 = vadd.f32 %v44, %v236
  %v238 = vpop.f32.mrb[0].mxu0
  %239 = vdwg.mxu0
  %vm240 = vcmask 523264
  %241 = vst.msk [vmem:[%s5] sm:$0xff] %vm240, %v162
  %242 = vst.msk [vmem:[%s5 + $0x8] sm:$0xff] %vm240, %v167
  %243 = vst.msk [vmem:[%s5 + $0x10] sm:$0xff] %vm240, %v172
  %244 = vst.msk [vmem:[%s5 + $0x18] sm:$0xff] %vm240, %v177
  %245 = vst.msk [vmem:[%s5 + $0x20] sm:$0xff] %vm240, %v182
  %246 = vst.msk [vmem:[%s5 + $0x28] sm:$0xff] %vm240, %v187
  %247 = vst.msk [vmem:[%s5 + $0x30] sm:$0xff] %vm240, %v192
  %248 = vst.msk [vmem:[%s5 + $0x38] sm:$0xff] %vm240, %v197
  %249 = vst.msk [vmem:[%s5 + $0x40] sm:$0xff] %vm240, %v202
  %250 = vst.msk [vmem:[%s5 + $0x48] sm:$0xff] %vm240, %v207
  %251 = vst.msk [vmem:[%s5 + $0x50] sm:$0xff] %vm240, %v212
  %252 = vst.msk [vmem:[%s5 + $0x58] sm:$0xff] %vm240, %v217
  %253 = vst.msk [vmem:[%s5 + $0x60] sm:$0xff] %vm240, %v222
  %254 = vst.msk [vmem:[%s5 + $0x68] sm:$0xff] %vm240, %v227
  %255 = vst.msk [vmem:[%s5 + $0x70] sm:$0xff] %vm240, %v232
  %256 = vst.msk [vmem:[%s5 + $0x78] sm:$0xff] %vm240, %v237
  %v257 = vld [vmem:[%s3] sm:$0x1]
  %v259 = vlaneseq
  %v260 = vshrl.u32 %v259, 7
  %v261 = vsub.s32 0, %v260
  %v262 = vrot.slane %v257, %v261
  %v264 = vmul.f32 %v162, %v262
  %v265 = vmul.f32 %v167, %v262
  %v266 = vmul.f32 %v172, %v262
  %v267 = vmul.f32 %v177, %v262
  %v268 = vmul.f32 %v182, %v262
  %v269 = vmul.f32 %v187, %v262
  %v270 = vmul.f32 %v192, %v262
  %v271 = vmul.f32 %v197, %v262
  %v272 = vmul.f32 %v202, %v262
  %v273 = vmul.f32 %v207, %v262
  %v274 = vmul.f32 %v212, %v262
  %v275 = vmul.f32 %v217, %v262
  %v276 = vmul.f32 %v222, %v262
  %v277 = vmul.f32 %v227, %v262
  %v278 = vmul.f32 %v232, %v262
  %v279 = vmul.f32 %v237, %v262
  %280 = vst.msk [vmem:[%s4] sm:$0xff] %vm240, %v264
  %281 = vst.msk [vmem:[%s4 + $0x8] sm:$0xff] %vm240, %v265
  %282 = vst.msk [vmem:[%s4 + $0x10] sm:$0xff] %vm240, %v266
  %283 = vst.msk [vmem:[%s4 + $0x18] sm:$0xff] %vm240, %v267
  %284 = vst.msk [vmem:[%s4 + $0x20] sm:$0xff] %vm240, %v268
  %285 = vst.msk [vmem:[%s4 + $0x28] sm:$0xff] %vm240, %v269
  %286 = vst.msk [vmem:[%s4 + $0x30] sm:$0xff] %vm240, %v270
  %287 = vst.msk [vmem:[%s4 + $0x38] sm:$0xff] %vm240, %v271
  %288 = vst.msk [vmem:[%s4 + $0x40] sm:$0xff] %vm240, %v272
  %289 = vst.msk [vmem:[%s4 + $0x48] sm:$0xff] %vm240, %v273
  %290 = vst.msk [vmem:[%s4 + $0x50] sm:$0xff] %vm240, %v274
  %291 = vst.msk [vmem:[%s4 + $0x58] sm:$0xff] %vm240, %v275
  %292 = vst.msk [vmem:[%s4 + $0x60] sm:$0xff] %vm240, %v276
  %293 = vst.msk [vmem:[%s4 + $0x68] sm:$0xff] %vm240, %v277
  %294 = vst.msk [vmem:[%s4 + $0x70] sm:$0xff] %vm240, %v278
  %295 = vst.msk [vmem:[%s4 + $0x78] sm:$0xff] %vm240, %v279
  // Predicated region
  $region18: #{tpu_custom_call.1} parent=0 // pred_check
    _
  $region19: #{tpu_custom_call.1} parent=0 // pred_check_branch
    %297 = sbr.rel (0) target = $region21
  $region20: #{tpu_custom_call.1} parent=0 // pred_region
    _
  $region21: #{tpu_custom_call.1} parent=0 // pred_fallthru
    _
  // Predicated region
  $region22: #{tpu_custom_call.1} parent=0 // pred_check
    _
  $region23: #{tpu_custom_call.1} parent=0 // pred_check_branch
    %299 = sbr.rel (0) target = $region25
  $region24: #{tpu_custom_call.1} parent=0 // pred_region
    _
  $region25: #{tpu_custom_call.1} parent=0 // pred_fallthru
    _
  // Predicated region
  $region26: #{tpu_custom_call.1} parent=0 // pred_check
    _
  $region27: #{tpu_custom_call.1} parent=0 // pred_check_branch
    %301 = sbr.rel (0) target = $region29
  $region28: #{tpu_custom_call.1} parent=0 // pred_region
    _
  $region29: #{tpu_custom_call.1} parent=0 // pred_fallthru
    _
  // Predicated region
  $region30: #{tpu_custom_call.1} parent=0 // pred_check
    _
  $region31: #{tpu_custom_call.1} parent=0 // pred_check_branch
    %303 = sbr.rel (0) target = $region33
  $region32: #{tpu_custom_call.1} parent=0 // pred_region
    _
  $region33: #{tpu_custom_call.1} parent=0 // pred_fallthru
    _

</llo_original>
